<compile_context>
chip_gen: v6e
topology: v6e:2x2x1
jax: 0.10.0
libtpu: 0.0.40
codegen_flags: <defaults>
</compile_context>

<pallas_src>
import functools

import jax
import jax.numpy as jnp
from jax import lax
from jax.experimental import pallas as pl
from jax.experimental.pallas import tpu as pltpu


# ----------------------------------------------------------------------------
# Pallas kernels: one matmul + fused epilogue per layer
# ----------------------------------------------------------------------------
def _mm_bias_kernel(x_ref, w_ref, b_ref, o_ref):
    o_ref[...] = jnp.dot(x_ref[...], w_ref[...],
                         preferred_element_type=jnp.float32) + b_ref[...]


def _mm_bn_relu_kernel(x_ref, w_ref, b_ref, g_ref, be_ref, o_ref, *,
                       valid_rows, eps):
    """matmul + bias + BatchNorm (batch stats, biased var == torch train mode)
    + ReLU, all on the f32 MXU result.  Rows >= valid_rows are zero padding and
    are masked out of the statistics (the wrapper slices them off)."""
    y = jnp.dot(x_ref[...], w_ref[...],
                preferred_element_type=jnp.float32) + b_ref[...]
    mp = y.shape[0]
    if valid_rows == mp:                      # no row padding: plain mean/var
        mean = jnp.mean(y, axis=0, keepdims=True)
        yc = y - mean
        var = jnp.mean(yc * yc, axis=0, keepdims=True)
    else:                                     # mask out the zero-padded rows
        row = lax.broadcasted_iota(jnp.int32, (mp, 1), 0)
        mask = (row < valid_rows).astype(jnp.float32)
        inv = 1.0 / float(valid_rows)
        mean = jnp.sum(y * mask, axis=0, keepdims=True) * inv
        yc = y - mean
        var = jnp.sum(yc * yc * mask, axis=0, keepdims=True) * inv
    yn = yc * lax.rsqrt(var + eps) * g_ref[...] + be_ref[...]
    o_ref[...] = jnp.maximum(yn, 0.0)


def _mm_tanh_kernel(x_ref, w_ref, b_ref, o_ref):
    y = jnp.dot(x_ref[...], w_ref[...],
                preferred_element_type=jnp.float32) + b_ref[...]
    o_ref[...] = jnp.tanh(y)                  # tanh on the padded 128-lane block


# ----------------------------------------------------------------------------
# Wrapper: pad to (8,128) multiples, pick the N tile, launch one fused kernel.
# ----------------------------------------------------------------------------
def _pad2(x, m0, m1):
    return jnp.pad(x, ((0, (-x.shape[0]) % m0), (0, (-x.shape[1]) % m1)))


def pallas_matmul_fused(x, w, b, gamma=None, beta=None, *,
                        epilogue="none", eps=1e-5):
    """y = epilogue(x @ w + b); x:(M,K), w:(K,N), b/gamma/beta:(N,)."""
    x = x.astype(jnp.float32)
    w = w.astype(jnp.float32)
    M, K = x.shape
    N = w.shape[1]

    xp = _pad2(x, 8, 128)
    wp = _pad2(w, 128, 128)
    Mp, Kp = xp.shape
    Np = wp.shape[1]
    bp = jnp.pad(b.astype(jnp.float32), (0, Np - N)).reshape(1, Np)

    # 256-wide N tiles for the v6e/v7x 256x256 MXU when the layer is wide
    # enough (also >= 2 parallel blocks for the v7x megacore); else 128.
    tn = 256 if (Np % 256 == 0 and Np >= 512) else 128
    grid = (Np // tn,)

    in_specs = [
        pl.BlockSpec((Mp, Kp), lambda j: (0, 0)),  # whole x, whole K: no K loop
        pl.BlockSpec((Kp, tn), lambda j: (0, j)),
        pl.BlockSpec((1, tn), lambda j: (0, j)),
    ]
    args = [xp, wp, bp]

    if epilogue == "bn_relu":
        gp = jnp.pad(gamma.astype(jnp.float32), (0, Np - N)).reshape(1, Np)
        bep = jnp.pad(beta.astype(jnp.float32), (0, Np - N)).reshape(1, Np)
        in_specs += [pl.BlockSpec((1, tn), lambda j: (0, j)),
                     pl.BlockSpec((1, tn), lambda j: (0, j))]
        args += [gp, bep]
        kernel = functools.partial(_mm_bn_relu_kernel, valid_rows=M, eps=eps)
    elif epilogue == "tanh":
        kernel = _mm_tanh_kernel
    else:
        kernel = _mm_bias_kernel

    out = pl.pallas_call(
        kernel,
        out_shape=jax.ShapeDtypeStruct((Mp, Np), jnp.float32),
        grid=grid,
        in_specs=in_specs,
        out_specs=pl.BlockSpec((Mp, tn), lambda j: (0, j)),
        compiler_params=pltpu.CompilerParams(
            dimension_semantics=("parallel",)),
    )(*args)
    return out[:M, :N]


# ----------------------------------------------------------------------------
# ConvTranspose2d (k=4, stride=2, pad=1) via zero-dilation + channels-last
# im2col + one fused Pallas matmul (bias + BN + ReLU / tanh in the epilogue).
# ----------------------------------------------------------------------------
def conv_transpose_nhwc(x_nhwc, W, b, gamma=None, beta=None, *,
                        epilogue="none"):
    """x:(N,H,W,Cin) channels-last; W: torch ConvTranspose2d layout
    (Cin,Cout,4,4).  Returns (N,2H,2W,Cout) channels-last."""
    N, H, Wd, Cin = x_nhwc.shape
    Cout = W.shape[1]
    OH, OW = 2 * H, 2 * Wd

    # zero-dilate by stride 2 and pad by k-1-p = 2 per side (channels-last glue)
    xd = jnp.zeros((N, 2 * H + 3, 2 * Wd + 3, Cin), jnp.float32)
    xd = xd.at[:, 2:2 * H + 1:2, 2:2 * Wd + 1:2, :].set(x_nhwc)

    # im2col directly in channels-last order -> rows (N*OH*OW, Cin*16)
    # TODO(synk): for large input_size, replace the 16x im2col expansion with 16
    # shifted accumulating matmuls inside one kernel to keep HBM traffic at 1x.
    cols = [xd[:, kh:kh + OH, kw:kw + OW, :]
            for kh in range(4) for kw in range(4)]
    patches = jnp.stack(cols, axis=-1)                 # (N, OH, OW, Cin, 16)
    rows = patches.reshape(N * OH * OW, Cin * 16)

    # flipped kernel laid out as (Cin*16, Cout) matching the patch column order
    Wmat = W[:, :, ::-1, ::-1].transpose(0, 2, 3, 1).reshape(Cin * 16, Cout)

    out_rows = pallas_matmul_fused(rows, Wmat, b, gamma, beta,
                                   epilogue=epilogue)
    return out_rows.reshape(N, OH, OW, Cout)


# ----------------------------------------------------------------------------
# Full pre_G forward (Pallas)
# ----------------------------------------------------------------------------
def pre_g_forward_pallas(x, p, input_size):
    N = x.shape[0]
    s4 = input_size // 4

    h = pallas_matmul_fused(x, p["W1"].T, p["b1"], p["g1"], p["be1"],
                            epilogue="bn_relu")
    h = pallas_matmul_fused(h, p["W2"].T, p["b2"], p["g2"], p["be2"],
                            epilogue="bn_relu")

    # torch's view is (N,128,s4,s4) NCHW; switch to NHWC once (tiny tensor) and
    # stay channels-last through both deconvs.
    h = h.reshape(N, 128, s4, s4).transpose(0, 2, 3, 1)

    y = conv_transpose_nhwc(h, p["Wd1"], p["bd1"], p["g3"], p["be3"],
                            epilogue="bn_relu")        # BatchNorm2d over (N,H,W)
    y = conv_transpose_nhwc(y, p["Wd2"], p["bd2"], epilogue="tanh")
    return y.transpose(0, 3, 1, 2)                     # NCHW output like torch


# ----------------------------------------------------------------------------
# Pure-JAX reference (for correctness check only)
# ----------------------------------------------------------------------------
def _ref_conv_transpose(x, W, b):
    Wf = jnp.transpose(W, (1, 0, 2, 3))[:, :, ::-1, ::-1]   # (Cout, Cin, 4, 4)
    y = lax.conv_general_dilated(
        x, Wf, window_strides=(1, 1), padding=[(2, 2), (2, 2)],
        lhs_dilation=(2, 2), dimension_numbers=("NCHW", "OIHW", "NCHW"))
    return y + b.reshape(1, -1, 1, 1)


def _ref_bn1d(x, g, b, eps=1e-5):
    m = x.mean(axis=0, keepdims=True)
    v = ((x - m) ** 2).mean(axis=0, keepdims=True)
    return (x - m) / jnp.sqrt(v + eps) * g + b


def pre_g_forward_ref(x, p, input_size):
    N = x.shape[0]
    s4 = input_size // 4
    h = x @ p["W1"].T + p["b1"]
    h = jnp.maximum(_ref_bn1d(h, p["g1"], p["be1"]), 0.0)
    h = h @ p["W2"].T + p["b2"]
    h = jnp.maximum(_ref_bn1d(h, p["g2"], p["be2"]), 0.0)
    h = h.reshape(N, 128, s4, s4)
    y = _ref_conv_transpose(h, p["Wd1"], p["bd1"])
    m = y.mean(axis=(0, 2, 3), keepdims=True)
    v = ((y - m) ** 2).mean(axis=(0, 2, 3), keepdims=True)
    y = (y - m) / jnp.sqrt(v + 1e-5) * p["g3"].reshape(1, -1, 1, 1) \
        + p["be3"].reshape(1, -1, 1, 1)
    y = jnp.maximum(y, 0.0)
    y = _ref_conv_transpose(y, p["Wd2"], p["bd2"])
    return jnp.tanh(y)


# ----------------------------------------------------------------------------
# main
# ----------------------------------------------------------------------------
if __name__ == "__main__":
    batch, input_dim, output_dim, input_size = 4, 32, 1, 8
    s4 = input_size // 4
    fc2_out = 128 * s4 * s4

    key = jax.random.PRNGKey(0)
    ks = jax.random.split(key, 6)
    p = {
        # nn.Linear(input_dim, 1024): weight (out,in) ~ N(0, 0.02), bias zero
        "W1": 0.02 * jax.random.normal(ks[0], (1024, input_dim), jnp.float32),
        "b1": jnp.zeros((1024,), jnp.float32),
        "g1": jnp.ones((1024,), jnp.float32),
        "be1": jnp.zeros((1024,), jnp.float32),
        # nn.Linear(1024, 128*(S/4)^2)
        "W2": 0.02 * jax.random.normal(ks[1], (fc2_out, 1024), jnp.float32),
        "b2": jnp.zeros((fc2_out,), jnp.float32),
        "g2": jnp.ones((fc2_out,), jnp.float32),
        "be2": jnp.zeros((fc2_out,), jnp.float32),
        # nn.ConvTranspose2d(128, 64, 4, 2, 1): weight (Cin, Cout, 4, 4)
        "Wd1": 0.02 * jax.random.normal(ks[2], (128, 64, 4, 4), jnp.float32),
        "bd1": jnp.zeros((64,), jnp.float32),
        "g3": jnp.ones((64,), jnp.float32),
        "be3": jnp.zeros((64,), jnp.float32),
        # nn.ConvTranspose2d(64, output_dim, 4, 2, 1)
        "Wd2": 0.02 * jax.random.normal(ks[3], (64, output_dim, 4, 4), jnp.float32),
        "bd2": jnp.zeros((output_dim,), jnp.float32),
    }

    x = jax.random.normal(ks[4], (batch, input_dim), jnp.float32)

    out = pre_g_forward_pallas(x, p, input_size)
    out = jax.block_until_ready(out)
    assert out.shape == (batch, output_dim, input_size, input_size), out.shape

    ref = jax.block_until_ready(pre_g_forward_ref(x, p, input_size))
    assert jnp.allclose(out, ref, atol=2e-3, rtol=2e-3), \
        f"max abs diff {jnp.max(jnp.abs(out - ref))}"

    print("KERNEL_OK")
</pallas_src>

<mosaic_0001>
module attributes {stable_mosaic.version = 11 : i64} {
  func.func @_mm_bn_relu_kernel(%arg0: i32, %arg1: memref<8x128xf32, #tpu.memory_space<vmem>>, %arg2: memref<128x256xf32, #tpu.memory_space<vmem>>, %arg3: memref<1x256xf32, #tpu.memory_space<vmem>>, %arg4: memref<1x256xf32, #tpu.memory_space<vmem>>, %arg5: memref<1x256xf32, #tpu.memory_space<vmem>>, %arg6: memref<8x256xf32, #tpu.memory_space<vmem>>) attributes {dimension_semantics = [#tpu.dimension_semantics<parallel>], iteration_bounds = array<i64: 4>, scalar_prefetch = 0 : i64, scratch_operands = 0 : i64, tpu.core_type = #tpu.core_type<tc>, window_params = [{pipeline_mode = #tpu.pipeline_mode<synchronous>, transform_indices = @transform_0, window_bounds = array<i64: 8, 128>}, {transform_indices = @transform_1, window_bounds = array<i64: 128, 256>}, {transform_indices = @transform_2, window_bounds = array<i64: 1, 256>}, {transform_indices = @transform_3, window_bounds = array<i64: 1, 256>}, {transform_indices = @transform_4, window_bounds = array<i64: 1, 256>}, {transform_indices = @transform_5, window_bounds = array<i64: 8, 256>}]} {
    %c0 = arith.constant 0 : index
    %c0_0 = arith.constant 0 : index
    %0 = vector.load %arg1[%c0, %c0_0] : memref<8x128xf32, #tpu.memory_space<vmem>>, vector<8x128xf32>
    %c0_1 = arith.constant 0 : index
    %c0_2 = arith.constant 0 : index
    %1 = vector.load %arg2[%c0_1, %c0_2] : memref<128x256xf32, #tpu.memory_space<vmem>>, vector<128x256xf32>
    %cst = arith.constant dense<0.000000e+00> : vector<8x256xf32>
    %2 = tpu.matmul %0, %1, %cst {dimension_numbers = #tpu.dot_dimension_numbers<[1], [0], [0], [1], [0, 0, 1, 1], [], []>} : vector<8x128xf32>, vector<128x256xf32>, vector<8x256xf32> -> vector<8x256xf32>
    %c0_3 = arith.constant 0 : index
    %c0_4 = arith.constant 0 : index
    %3 = vector.load %arg3[%c0_3, %c0_4] : memref<1x256xf32, #tpu.memory_space<vmem>>, vector<1x256xf32>
    %4 = vector.broadcast %3 : vector<1x256xf32> to vector<8x256xf32>
    %5 = arith.addf %2, %4 : vector<8x256xf32>
    %6 = tpu.iota {dimensions = array<i32: 0>} : vector<8x1xi32>
    %c4_i32 = arith.constant 4 : i32
    %7 = vector.broadcast %c4_i32 : i32 to vector<8x1xi32>
    %8 = arith.cmpi slt, %6, %7 : vector<8x1xi32>
    %9 = arith.extui %8 : vector<8x1xi1> to vector<8x1xi32>
    %10 = arith.sitofp %9 : vector<8x1xi32> to vector<8x1xf32>
    %11 = vector.broadcast %10 : vector<8x1xf32> to vector<8x256xf32>
    %12 = arith.mulf %5, %11 : vector<8x256xf32>
    %cst_5 = arith.constant dense<0.000000e+00> : vector<256xf32>
    %13 = vector.multi_reduction <add>, %12, %cst_5 [0] : vector<8x256xf32> to vector<256xf32>
    %14 = vector.shape_cast %13 : vector<256xf32> to vector<1x256xf32>
    %cst_6 = arith.constant 2.500000e-01 : f32
    %15 = vector.broadcast %cst_6 : f32 to vector<1x256xf32>
    %16 = arith.mulf %14, %15 : vector<1x256xf32>
    %17 = vector.broadcast %16 : vector<1x256xf32> to vector<8x256xf32>
    %18 = arith.subf %5, %17 : vector<8x256xf32>
    %19 = arith.mulf %18, %18 : vector<8x256xf32>
    %20 = vector.broadcast %10 : vector<8x1xf32> to vector<8x256xf32>
    %21 = arith.mulf %19, %20 : vector<8x256xf32>
    %cst_7 = arith.constant dense<0.000000e+00> : vector<256xf32>
    %22 = vector.multi_reduction <add>, %21, %cst_7 [0] : vector<8x256xf32> to vector<256xf32>
    %23 = vector.shape_cast %22 : vector<256xf32> to vector<1x256xf32>
    %cst_8 = arith.constant 2.500000e-01 : f32
    %24 = vector.broadcast %cst_8 : f32 to vector<1x256xf32>
    %25 = arith.mulf %23, %24 : vector<1x256xf32>
    %cst_9 = arith.constant 9.99999974E-6 : f32
    %26 = vector.broadcast %cst_9 : f32 to vector<1x256xf32>
    %27 = arith.addf %25, %26 : vector<1x256xf32>
    %28 = math.rsqrt %27 : vector<1x256xf32>
    %29 = vector.broadcast %28 : vector<1x256xf32> to vector<8x256xf32>
    %30 = arith.mulf %18, %29 : vector<8x256xf32>
    %c0_10 = arith.constant 0 : index
    %c0_11 = arith.constant 0 : index
    %31 = vector.load %arg4[%c0_10, %c0_11] : memref<1x256xf32, #tpu.memory_space<vmem>>, vector<1x256xf32>
    %32 = vector.broadcast %31 : vector<1x256xf32> to vector<8x256xf32>
    %33 = arith.mulf %30, %32 : vector<8x256xf32>
    %c0_12 = arith.constant 0 : index
    %c0_13 = arith.constant 0 : index
    %34 = vector.load %arg5[%c0_12, %c0_13] : memref<1x256xf32, #tpu.memory_space<vmem>>, vector<1x256xf32>
    %35 = vector.broadcast %34 : vector<1x256xf32> to vector<8x256xf32>
    %36 = arith.addf %33, %35 : vector<8x256xf32>
    %cst_14 = arith.constant 0.000000e+00 : f32
    %37 = vector.broadcast %cst_14 : f32 to vector<8x256xf32>
    %38 = arith.maximumf %36, %37 : vector<8x256xf32>
    %c0_15 = arith.constant 0 : index
    %c0_16 = arith.constant 0 : index
    %39 = vector.load %arg6[%c0_15, %c0_16] : memref<8x256xf32, #tpu.memory_space<vmem>>, vector<8x256xf32>
    tpu.vector_store %arg6[%c0_15, %c0_16], %38 {strides = array<i32>} : memref<8x256xf32, #tpu.memory_space<vmem>>, vector<8x256xf32>,
    return
  }
  func.func @transform_0(%arg0: i32) -> (i32, i32) {
    %c0_i32 = arith.constant 0 : i32
    %c0_i32_0 = arith.constant 0 : i32
    %c0_i32_1 = arith.constant 0 : i32
    return %c0_i32, %c0_i32_0 : i32, i32
  }
  func.func @transform_1(%arg0: i32) -> (i32, i32) {
    %c0_i32 = arith.constant 0 : i32
    %c0_i32_0 = arith.constant 0 : i32
    return %c0_i32, %arg0 : i32, i32
  }
  func.func @transform_2(%arg0: i32) -> (i32, i32) {
    %c0_i32 = arith.constant 0 : i32
    %c0_i32_0 = arith.constant 0 : i32
    return %c0_i32, %arg0 : i32, i32
  }
  func.func @transform_3(%arg0: i32) -> (i32, i32) {
    %c0_i32 = arith.constant 0 : i32
    %c0_i32_0 = arith.constant 0 : i32
    return %c0_i32, %arg0 : i32, i32
  }
  func.func @transform_4(%arg0: i32) -> (i32, i32) {
    %c0_i32 = arith.constant 0 : i32
    %c0_i32_0 = arith.constant 0 : i32
    return %c0_i32, %arg0 : i32, i32
  }
  func.func @transform_5(%arg0: i32) -> (i32, i32) {
    %c0_i32 = arith.constant 0 : i32
    %c0_i32_0 = arith.constant 0 : i32
    return %c0_i32, %arg0 : i32, i32
  }
}

</mosaic_0001>

<llo_original>
// kernel: tpu_custom_call.1
$region0: #{tpu_custom_call.1}
  #allocation0 [shape = 'u32[]', space=smem, size = 0x4, offset = 0x4, fixed_abs, tag = 'smem constant byte address 0x4 - core index']
  #allocation1 [shape = 'u32[144,128]{1,0:T(1,128)}', space=vmem, size = 0x12000, scoped, tag = 'internal scratch']
  %s0 = inlined_call_operand.hbm [shape: f32[8,128], index: 0, kind: input, shape index: {}]
  %s1 = inlined_call_operand.hbm [shape: f32[128,1024], index: 1, kind: input, shape index: {}]
  %s2 = inlined_call_operand.hbm [shape: f32[1,1024], index: 2, kind: input, shape index: {}]
  %s3 = inlined_call_operand.hbm [shape: f32[1,1024], index: 3, kind: input, shape index: {}]
  %s4 = inlined_call_operand.hbm [shape: f32[1,1024], index: 4, kind: input, shape index: {}]
  %s5 = inlined_call_operand.hbm [shape: f32[8,1024], index: 5, kind: output, shape index: {}]
  %s6 = sld [smem:[#allocation0]]
  $region73: #{tpu_custom_call.1} parent=0
    _
  %s8 = ssub.s32 1, %s6
  %s9 = scalar_select 0, %s8, %s6
  $region1: #{tpu_custom_call.1} parent=0
    #allocation2 [shape = 'u8[4096]{0}', space=vmem, size = 0x1000, scoped, tag = 'input window, operand 0, single buffered']
    #allocation3 [shape = 's32[2]{0}', space=sflag, size = 0x8, scoped, tag = 'scoped memory for tpu_custom_call.1']
    #allocation4 [shape = 's32[2]{0}', space=sflag, size = 0x8, scoped, tag = 'scoped memory for tpu_custom_call.1']
    #allocation5 [shape = 'u8[262144]{0}', space=vmem, size = 0x40000, scoped, tag = 'input window, operand 1']
    #allocation6 [shape = 's32[2]{0}', space=sflag, size = 0x8, scoped, tag = 'scoped memory for tpu_custom_call.1']
    #allocation7 [shape = 'u8[2048]{0}', space=vmem, size = 0x800, scoped, tag = 'input window, operand 2']
    #allocation8 [shape = 'u8[2048]{0}', space=vmem, size = 0x800, scoped, tag = 'input window, operand 3']
    #allocation9 [shape = 's32[2]{0}', space=sflag, size = 0x8, scoped, tag = 'scoped memory for tpu_custom_call.1']
    #allocation10 [shape = 'u8[2048]{0}', space=vmem, size = 0x800, scoped, tag = 'input window, operand 4']
    #allocation11 [shape = 'u8[16384]{0}', space=vmem, size = 0x4000, scoped, tag = 'output window, operand 0']
    %10 = vsyncpa [#allocation3], 0
    %11 = vsyncpa [#allocation6], 0
    %s12 = scalar_lea.sflag [#allocation6], 1
    %13 = vsyncpa %s12, 0
    %14 = vsyncpa [#allocation9], 0
    %s15 = scalar_lea.sflag [#allocation9], 1
    %16 = vsyncpa %s15, 0
    %17 = vsyncpa [#allocation4], 0
    %s18 = scalar_lea.sflag [#allocation4], 1
    %19 = vsyncpa %s18, 0
    loop: start=0, step=1, limit=6
    $region2: #{tpu_custom_call.1} parent=1 // loop_pre_header
      _
    $region3: #{tpu_custom_call.1} parent=1 // loop_header
      %s21 = sphi 0, %s25
      %p22 = scmp.ge.s32.totalorder %s21, 6
      %s29 = sphi 0, %s29
      %s31 = sphi 0, %s29
      %s32 = sphi 0, %s31
      %s46 = sphi 0, %s32
      %s52 = sphi 0, %s54
      %s55 = sphi 0, %s52
      %s56 = sphi 0, %s55
      %s72 = sphi 0, %s56
      %s78 = sphi 0, %s80
      %s81 = sphi 0, %s78
      %s82 = sphi 0, %s81
      %s98 = sphi 0, %s82
      %s104 = sphi 0, %s106
      %s107 = sphi 0, %s104
      %s108 = sphi 0, %s107
      %s124 = sphi 0, %s108
      %s130 = sphi 0, %s132
      %s133 = sphi 0, %s130
      %s134 = sphi 0, %s133
      %s150 = sphi 0, %s134
      %s156 = sphi 0, %s158
      %s159 = sphi 0, %s156
      %s160 = sphi 0, %s159
      %s176 = sphi 0, %s160
    $region4: #{tpu_custom_call.1} parent=1 // loop_header_branch
      %24 = sbr.rel (%p22) target = $region8
    $region5: #{tpu_custom_call.1} parent=1 // loop_body
      %s26 = ssub.s32 %s21, 1
      %s27 = ssub.s32 %s21, 2
      %s28 = sadd.s32 %s21, 1
      %s30 = sadd.s32 %s29, 1
      %p33 = scmp.eq.s32.totalorder %s21, 3
      %p34 = scmp.ne.s32.totalorder %s29, %s31
      %p35 = scmp.eq.s32.totalorder %s21, 0
      %p36 = por %p34, %p35
      %p37 = scmp.ne.s32.totalorder %s29, %s31
      %p38 = scmp.eq.s32.totalorder %s26, 3
      %p39 = por %p37, %p38
      %p40 = scmp.ne.s32.totalorder %s31, %s32
      %p41 = scmp.eq.s32.totalorder %s26, 0
      %p42 = por %p40, %p41
      %p43 = scmp.ne.s32.totalorder %s31, %s32
      %p44 = scmp.eq.s32.totalorder %s27, 3
      %p45 = por %p43, %p44
      %p47 = scmp.ne.s32.totalorder %s32, %s46
      %p48 = scmp.eq.s32.totalorder %s27, 0
      %p49 = por %p47, %p48
      %s50 = ssub.s32 %s21, %s28
      %p51 = scmp.eq.s32.totalorder %s50, 0
      %s53 = sadd.s32 %s52, 1
      %s54 = scalar_select %p51, %s52, %s53
      %p57 = pneg %p51
      %p58 = scmp.eq.s32.totalorder %s21, 3
      %p59 = por %p57, %p58
      %p60 = scmp.ne.s32.totalorder %s52, %s55
      %p61 = scmp.eq.s32.totalorder %s21, 0
      %p62 = por %p60, %p61
      %p63 = scmp.ne.s32.totalorder %s52, %s55
      %p64 = scmp.eq.s32.totalorder %s26, 3
      %p65 = por %p63, %p64
      %p66 = scmp.ne.s32.totalorder %s55, %s56
      %p67 = scmp.eq.s32.totalorder %s26, 0
      %p68 = por %p66, %p67
      %p69 = scmp.ne.s32.totalorder %s55, %s56
      %p70 = scmp.eq.s32.totalorder %s27, 3
      %p71 = por %p69, %p70
      %p73 = scmp.ne.s32.totalorder %s56, %s72
      %p74 = scmp.eq.s32.totalorder %s27, 0
      %p75 = por %p73, %p74
      %s76 = ssub.s32 %s21, %s28
      %p77 = scmp.eq.s32.totalorder %s76, 0
      %s79 = sadd.s32 %s78, 1
      %s80 = scalar_select %p77, %s78, %s79
      %p83 = pneg %p77
      %p84 = scmp.eq.s32.totalorder %s21, 3
      %p85 = por %p83, %p84
      %p86 = scmp.ne.s32.totalorder %s78, %s81
      %p87 = scmp.eq.s32.totalorder %s21, 0
      %p88 = por %p86, %p87
      %p89 = scmp.ne.s32.totalorder %s78, %s81
      %p90 = scmp.eq.s32.totalorder %s26, 3
      %p91 = por %p89, %p90
      %p92 = scmp.ne.s32.totalorder %s81, %s82
      %p93 = scmp.eq.s32.totalorder %s26, 0
      %p94 = por %p92, %p93
      %p95 = scmp.ne.s32.totalorder %s81, %s82
      %p96 = scmp.eq.s32.totalorder %s27, 3
      %p97 = por %p95, %p96
      %p99 = scmp.ne.s32.totalorder %s82, %s98
      %p100 = scmp.eq.s32.totalorder %s27, 0
      %p101 = por %p99, %p100
      %s102 = ssub.s32 %s21, %s28
      %p103 = scmp.eq.s32.totalorder %s102, 0
      %s105 = sadd.s32 %s104, 1
      %s106 = scalar_select %p103, %s104, %s105
      %p109 = pneg %p103
      %p110 = scmp.eq.s32.totalorder %s21, 3
      %p111 = por %p109, %p110
      %p112 = scmp.ne.s32.totalorder %s104, %s107
      %p113 = scmp.eq.s32.totalorder %s21, 0
      %p114 = por %p112, %p113
      %p115 = scmp.ne.s32.totalorder %s104, %s107
      %p116 = scmp.eq.s32.totalorder %s26, 3
      %p117 = por %p115, %p116
      %p118 = scmp.ne.s32.totalorder %s107, %s108
      %p119 = scmp.eq.s32.totalorder %s26, 0
      %p120 = por %p118, %p119
      %p121 = scmp.ne.s32.totalorder %s107, %s108
      %p122 = scmp.eq.s32.totalorder %s27, 3
      %p123 = por %p121, %p122
      %p125 = scmp.ne.s32.totalorder %s108, %s124
      %p126 = scmp.eq.s32.totalorder %s27, 0
      %p127 = por %p125, %p126
      %s128 = ssub.s32 %s21, %s28
      %p129 = scmp.eq.s32.totalorder %s128, 0
      %s131 = sadd.s32 %s130, 1
      %s132 = scalar_select %p129, %s130, %s131
      %p135 = pneg %p129
      %p136 = scmp.eq.s32.totalorder %s21, 3
      %p137 = por %p135, %p136
      %p138 = scmp.ne.s32.totalorder %s130, %s133
      %p139 = scmp.eq.s32.totalorder %s21, 0
      %p140 = por %p138, %p139
      %p141 = scmp.ne.s32.totalorder %s130, %s133
      %p142 = scmp.eq.s32.totalorder %s26, 3
      %p143 = por %p141, %p142
      %p144 = scmp.ne.s32.totalorder %s133, %s134
      %p145 = scmp.eq.s32.totalorder %s26, 0
      %p146 = por %p144, %p145
      %p147 = scmp.ne.s32.totalorder %s133, %s134
      %p148 = scmp.eq.s32.totalorder %s27, 3
      %p149 = por %p147, %p148
      %p151 = scmp.ne.s32.totalorder %s134, %s150
      %p152 = scmp.eq.s32.totalorder %s27, 0
      %p153 = por %p151, %p152
      %s154 = ssub.s32 %s21, %s28
      %p155 = scmp.eq.s32.totalorder %s154, 0
      %s157 = sadd.s32 %s156, 1
      %s158 = scalar_select %p155, %s156, %s157
      %p161 = pneg %p155
      %p162 = scmp.eq.s32.totalorder %s21, 3
      %p163 = por %p161, %p162
      %p164 = scmp.ne.s32.totalorder %s156, %s159
      %p165 = scmp.eq.s32.totalorder %s21, 0
      %p166 = por %p164, %p165
      %p167 = scmp.ne.s32.totalorder %s156, %s159
      %p168 = scmp.eq.s32.totalorder %s26, 3
      %p169 = por %p167, %p168
      %p170 = scmp.ne.s32.totalorder %s159, %s160
      %p171 = scmp.eq.s32.totalorder %s26, 0
      %p172 = por %p170, %p171
      %p173 = scmp.ne.s32.totalorder %s159, %s160
      %p174 = scmp.eq.s32.totalorder %s27, 3
      %p175 = por %p173, %p174
      %p177 = scmp.ne.s32.totalorder %s160, %s176
      %p178 = scmp.eq.s32.totalorder %s27, 0
      %p179 = por %p177, %p178
      %p180 = scmp.le.s32.totalorder 1, %s21
      %p181 = scmp.lt.s32.totalorder %s21, 5
      %p182 = pnand %p180, %p181
      %p183 = pneg %p182
      // Predicated region
      $region9: #{tpu_custom_call.1} parent=5 // pred_check
        _
      $region10: #{tpu_custom_call.1} parent=5 // pred_check_branch
        %185 = sbr.rel (%p182) target = $region12
      $region11: #{tpu_custom_call.1} parent=5 // pred_region
        %s186 = ssub.s32 %s21, 1
        // Predicated region
        $region13: #{tpu_custom_call.1} parent=11 // pred_check
          %p187 = pneg %p42
        $region14: #{tpu_custom_call.1} parent=11 // pred_check_branch
          %189 = sbr.rel (%p187) target = $region16
        $region15: #{tpu_custom_call.1} parent=11 // pred_region
          %s191 = ssub.s32 128, 128
          %192 = vsyncadd [#allocation3], %s191
          %s194 = sshll.u32 [#allocation2], 4
          %s195 = int_to_ptr.vmem [resolvable:$true] %s194
          %197 = dma.hbm_to_vmem [thread:$0]  %s0, 128, %s195, [#allocation3]
        $region16: #{tpu_custom_call.1} parent=11 // pred_fallthru
          _
      $region12: #{tpu_custom_call.1} parent=5 // pred_fallthru
        _
      %p198 = scmp.lt.s32.totalorder %s21, 4
      // Predicated region
      $region17: #{tpu_custom_call.1} parent=5 // pred_check
        %p199 = pneg %p198
      $region18: #{tpu_custom_call.1} parent=5 // pred_check_branch
        %201 = sbr.rel (%p199) target = $region20
      $region19: #{tpu_custom_call.1} parent=5 // pred_region
        // Predicated region
        $region21: #{tpu_custom_call.1} parent=19 // pred_check
          %p202 = pneg %p62
        $region22: #{tpu_custom_call.1} parent=19 // pred_check_branch
          %204 = sbr.rel (%p202) target = $region24
        $region23: #{tpu_custom_call.1} parent=19 // pred_region
          %s205 = sand.u32 %s21, 1
          %s206 = scalar_lea.sflag [#allocation6], %s205
          %s207 = sand.u32 %s52, 1
          %s208 = smul.addr %s207, 256
          %s209 = scalar_lea.vmem [#allocation5], %s208
          %s210 = smul.u32 2, %s21
          %s212 = ssub.s32 4096, 4096
          %213 = vsyncadd %s206, %s212
          %s214 = smul.addr %s210, 128
          %s215 = scalar_lea.hbm %s1, %s214
          %s216 = sshll.u32 %s209, 4
          %s217 = int_to_ptr.vmem [resolvable:$true] %s216
          %222 = dma.hbm_to_vmem [thread:$0]  %s215, 4096, %s217, %s206, 1024, 256, 16
        $region24: #{tpu_custom_call.1} parent=19 // pred_fallthru
          _
        // Predicated region
        $region25: #{tpu_custom_call.1} parent=19 // pred_check
          %p223 = pneg %p88
        $region26: #{tpu_custom_call.1} parent=19 // pred_check_branch
          %225 = sbr.rel (%p223) target = $region28
        $region27: #{tpu_custom_call.1} parent=19 // pred_region
          %s226 = sand.u32 %s21, 1
          %s227 = scalar_lea.sflag [#allocation6], %s226
          %s228 = sand.u32 %s78, 1
          %s229 = smul.addr %s228, 2
          %s230 = scalar_lea.vmem [#allocation7], %s229
          %s231 = smul.u32 2, %s21
          %s233 = ssub.s32 32, 32
          %234 = vsyncadd %s227, %s233
          %s235 = smul.addr %s231, 16
          %s236 = scalar_lea.hbm %s2, %s235
          %s238 = sshll.u32 %s230, 4
          %s239 = int_to_ptr.vmem [resolvable:$true] %s238
          %241 = dma.hbm_to_vmem [thread:$0]  %s236, 32, %s239, %s227
        $region28: #{tpu_custom_call.1} parent=19 // pred_fallthru
          _
        // Predicated region
        $region29: #{tpu_custom_call.1} parent=19 // pred_check
          %p242 = pneg %p114
        $region30: #{tpu_custom_call.1} parent=19 // pred_check_branch
          %244 = sbr.rel (%p242) target = $region32
        $region31: #{tpu_custom_call.1} parent=19 // pred_region
          %s245 = sand.u32 %s21, 1
          %s246 = scalar_lea.sflag [#allocation9], %s245
          %s247 = sand.u32 %s104, 1
          %s248 = smul.addr %s247, 2
          %s249 = scalar_lea.vmem [#allocation8], %s248
          %s250 = smul.u32 2, %s21
          %s252 = ssub.s32 32, 32
          %253 = vsyncadd %s246, %s252
          %s254 = smul.addr %s250, 16
          %s255 = scalar_lea.hbm %s3, %s254
          %s257 = sshll.u32 %s249, 4
          %s258 = int_to_ptr.vmem [resolvable:$true] %s257
          %260 = dma.hbm_to_vmem [thread:$0]  %s255, 32, %s258, %s246
        $region32: #{tpu_custom_call.1} parent=19 // pred_fallthru
          _
        // Predicated region
        $region33: #{tpu_custom_call.1} parent=19 // pred_check
          %p261 = pneg %p140
        $region34: #{tpu_custom_call.1} parent=19 // pred_check_branch
          %263 = sbr.rel (%p261) target = $region36
        $region35: #{tpu_custom_call.1} parent=19 // pred_region
          %s264 = sand.u32 %s21, 1
          %s265 = scalar_lea.sflag [#allocation9], %s264
          %s266 = sand.u32 %s130, 1
          %s267 = smul.addr %s266, 2
          %s268 = scalar_lea.vmem [#allocation10], %s267
          %s269 = smul.u32 2, %s21
          %s271 = ssub.s32 32, 32
          %272 = vsyncadd %s265, %s271
          %s273 = smul.addr %s269, 16
          %s274 = scalar_lea.hbm %s4, %s273
          %s276 = sshll.u32 %s268, 4
          %s277 = int_to_ptr.vmem [resolvable:$true] %s276
          %279 = dma.hbm_to_vmem [thread:$0]  %s274, 32, %s277, %s265
        $region36: #{tpu_custom_call.1} parent=19 // pred_fallthru
          _
      $region20: #{tpu_custom_call.1} parent=5 // pred_fallthru
        _
      %p280 = scmp.le.s32.totalorder 1, %s21
      %p281 = scmp.lt.s32.totalorder %s21, 5
      %p282 = pnand %p280, %p281
      %p283 = pneg %p282
      // Predicated region
      $region37: #{tpu_custom_call.1} parent=5 // pred_check
        _
      $region38: #{tpu_custom_call.1} parent=5 // pred_check_branch
        %285 = sbr.rel (%p282) target = $region40
      $region39: #{tpu_custom_call.1} parent=5 // pred_region
        %s286 = ssub.s32 %s21, 1
        // Predicated region
        $region41: #{tpu_custom_call.1} parent=39 // pred_check
          %p287 = pneg %p42
        $region42: #{tpu_custom_call.1} parent=39 // pred_check_branch
          %289 = sbr.rel (%p287) target = $region44
        $region43: #{tpu_custom_call.1} parent=39 // pred_region
          %290 = dma.done [#allocation3], 128
        $region44: #{tpu_custom_call.1} parent=39 // pred_fallthru
          _
        %s291 = sand.u32 %s26, 1
        %s292 = scalar_lea.sflag [#allocation6], %s291
        %s293 = sand.u32 %s55, 1
        %s294 = smul.addr %s293, 256
        %s295 = scalar_lea.vmem [#allocation5], %s294
        // Predicated region
        $region45: #{tpu_custom_call.1} parent=39 // pred_check
          %p296 = pneg %p68
        $region46: #{tpu_custom_call.1} parent=39 // pred_check_branch
          %298 = sbr.rel (%p296) target = $region48
        $region47: #{tpu_custom_call.1} parent=39 // pred_region
          %299 = dma.done %s292, 4096
        $region48: #{tpu_custom_call.1} parent=39 // pred_fallthru
          _
        %s300 = sand.u32 %s26, 1
        %s301 = scalar_lea.sflag [#allocation6], %s300
        %s302 = sand.u32 %s81, 1
        %s303 = smul.addr %s302, 2
        %s304 = scalar_lea.vmem [#allocation7], %s303
        // Predicated region
        $region49: #{tpu_custom_call.1} parent=39 // pred_check
          %p305 = pneg %p94
        $region50: #{tpu_custom_call.1} parent=39 // pred_check_branch
          %307 = sbr.rel (%p305) target = $region52
        $region51: #{tpu_custom_call.1} parent=39 // pred_region
          %308 = dma.done %s301, 32
        $region52: #{tpu_custom_call.1} parent=39 // pred_fallthru
          _
        %s309 = sand.u32 %s26, 1
        %s310 = scalar_lea.sflag [#allocation9], %s309
        %s311 = sand.u32 %s107, 1
        %s312 = smul.addr %s311, 2
        %s313 = scalar_lea.vmem [#allocation8], %s312
        // Predicated region
        $region53: #{tpu_custom_call.1} parent=39 // pred_check
          %p314 = pneg %p120
        $region54: #{tpu_custom_call.1} parent=39 // pred_check_branch
          %316 = sbr.rel (%p314) target = $region56
        $region55: #{tpu_custom_call.1} parent=39 // pred_region
          %317 = dma.done %s310, 32
        $region56: #{tpu_custom_call.1} parent=39 // pred_fallthru
          _
        %s318 = sand.u32 %s26, 1
        %s319 = scalar_lea.sflag [#allocation9], %s318
        %s320 = sand.u32 %s133, 1
        %s321 = smul.addr %s320, 2
        %s322 = scalar_lea.vmem [#allocation10], %s321
        // Predicated region
        $region57: #{tpu_custom_call.1} parent=39 // pred_check
          %p323 = pneg %p146
        $region58: #{tpu_custom_call.1} parent=39 // pred_check_branch
          %325 = sbr.rel (%p323) target = $region60
        $region59: #{tpu_custom_call.1} parent=39 // pred_region
          %326 = dma.done %s319, 32
        $region60: #{tpu_custom_call.1} parent=39 // pred_fallthru
          _
        %p327 = pneg %p42
        %p328 = pneg %p39
        %s329 = sand.u32 %s26, 1
        %s330 = scalar_lea.sflag [#allocation6], %s329
        %s331 = sand.u32 %s55, 1
        %s332 = smul.addr %s331, 256
        %s333 = scalar_lea.vmem [#allocation5], %s332
        %p334 = pneg %p68
        %p335 = pneg %p65
        %s336 = sand.u32 %s26, 1
        %s337 = scalar_lea.sflag [#allocation6], %s336
        %s338 = sand.u32 %s81, 1
        %s339 = smul.addr %s338, 2
        %s340 = scalar_lea.vmem [#allocation7], %s339
        %p341 = pneg %p94
        %p342 = pneg %p91
        %s343 = sand.u32 %s26, 1
        %s344 = scalar_lea.sflag [#allocation9], %s343
        %s345 = sand.u32 %s107, 1
        %s346 = smul.addr %s345, 2
        %s347 = scalar_lea.vmem [#allocation8], %s346
        %p348 = pneg %p120
        %p349 = pneg %p117
        %s350 = sand.u32 %s26, 1
        %s351 = scalar_lea.sflag [#allocation9], %s350
        %s352 = sand.u32 %s133, 1
        %s353 = smul.addr %s352, 2
        %s354 = scalar_lea.vmem [#allocation10], %s353
        %p355 = pneg %p146
        %p356 = pneg %p143
        %p357 = pneg %p172
        %p358 = pneg %p169
        %s359 = sand.u32 %s159, 1
        %s360 = scalar_lea.sflag [#allocation4], %s359
        %s361 = sand.u32 %s159, 1
        %s362 = smul.addr %s361, 16
        %s363 = scalar_lea.vmem [#allocation11], %s362
        %s364 = smul.u32 2, %s26
        %s365 = smul.u32 2, %s26
        %s366 = smul.u32 2, %s26
        %s367 = smul.u32 2, %s26
        %s368 = smul.u32 2, %s26
        %v369 = vld [vmem:[#allocation2] sm:$0xff]
        %v370 = vld [vmem:[%s295] sm:$0xff]
        %v371 = vld [vmem:[%s295 + $0x8] sm:$0xff]
        %v372 = vld [vmem:[%s295 + $0x10] sm:$0xff]
        %v373 = vld [vmem:[%s295 + $0x18] sm:$0xff]
        %v374 = vld [vmem:[%s295 + $0x20] sm:$0xff]
        %v375 = vld [vmem:[%s295 + $0x28] sm:$0xff]
        %v376 = vld [vmem:[%s295 + $0x30] sm:$0xff]
        %v377 = vld [vmem:[%s295 + $0x38] sm:$0xff]
        %v378 = vld [vmem:[%s295 + $0x40] sm:$0xff]
        %v379 = vld [vmem:[%s295 + $0x48] sm:$0xff]
        %v380 = vld [vmem:[%s295 + $0x50] sm:$0xff]
        %v381 = vld [vmem:[%s295 + $0x58] sm:$0xff]
        %v382 = vld [vmem:[%s295 + $0x60] sm:$0xff]
        %v383 = vld [vmem:[%s295 + $0x68] sm:$0xff]
        %v384 = vld [vmem:[%s295 + $0x70] sm:$0xff]
        %v385 = vld [vmem:[%s295 + $0x78] sm:$0xff]
        %v386 = vld [vmem:[%s295 + $0x80] sm:$0xff]
        %v387 = vld [vmem:[%s295 + $0x88] sm:$0xff]
        %v388 = vld [vmem:[%s295 + $0x90] sm:$0xff]
        %v389 = vld [vmem:[%s295 + $0x98] sm:$0xff]
        %v390 = vld [vmem:[%s295 + $0xa0] sm:$0xff]
        %v391 = vld [vmem:[%s295 + $0xa8] sm:$0xff]
        %v392 = vld [vmem:[%s295 + $0xb0] sm:$0xff]
        %v393 = vld [vmem:[%s295 + $0xb8] sm:$0xff]
        %v394 = vld [vmem:[%s295 + $0xc0] sm:$0xff]
        %v395 = vld [vmem:[%s295 + $0xc8] sm:$0xff]
        %v396 = vld [vmem:[%s295 + $0xd0] sm:$0xff]
        %v397 = vld [vmem:[%s295 + $0xd8] sm:$0xff]
        %v398 = vld [vmem:[%s295 + $0xe0] sm:$0xff]
        %v399 = vld [vmem:[%s295 + $0xe8] sm:$0xff]
        %v400 = vld [vmem:[%s295 + $0xf0] sm:$0xff]
        %v401 = vld [vmem:[%s295 + $0xf8] sm:$0xff]
        %v402 = vld [vmem:[%s304] sm:$0x3]
        %v404 = vlaneseq
        %v405 = vshrl.u32 %v404, 7
        %v406 = vsub.s32 0, %v405
        %v407 = vrot.slane %v402, %v406
        %v408 = vlaneseq
        %v409 = vshrl.u32 %v408, 7
        %v410 = vsub.s32 1, %v409
        %v411 = vrot.slane %v402, %v410
        %414 = vmatprep.subr.mxu0 %v401
        %415 = vmatpush1.msra.mxu0 %v400
        %416 = vmatprep.subr.mxu0 %v399
        %417 = vmatpush1.msra.mxu0 %v398
        %418 = vmatprep.subr.mxu0 %v397
        %419 = vmatpush1.msra.mxu0 %v396
        %420 = vmatprep.subr.mxu0 %v395
        %421 = vmatpush1.msra.mxu0 %v394
        %422 = vmatprep.subr.mxu0 %v393
        %423 = vmatpush1.msra.mxu0 %v392
        %424 = vmatprep.subr.mxu0 %v391
        %425 = vmatpush1.msra.mxu0 %v390
        %426 = vmatprep.subr.mxu0 %v389
        %427 = vmatpush1.msra.mxu0 %v388
        %428 = vmatprep.subr.mxu0 %v387
        %429 = vmatpush1.msra.mxu0 %v386
        %430 = vmatprep.subr.mxu0 %v385
        %431 = vmatpush1.msra.mxu0 %v384
        %432 = vmatprep.subr.mxu0 %v383
        %433 = vmatpush1.msra.mxu0 %v382
        %434 = vmatprep.subr.mxu0 %v381
        %435 = vmatpush1.msra.mxu0 %v380
        %436 = vmatprep.subr.mxu0 %v379
        %437 = vmatpush1.msra.mxu0 %v378
        %438 = vmatprep.subr.mxu0 %v377
        %439 = vmatpush1.msra.mxu0 %v376
        %440 = vmatprep.subr.mxu0 %v375
        %441 = vmatpush1.msra.mxu0 %v374
        %442 = vmatprep.subr.mxu0 %v373
        %443 = vmatpush1.msra.mxu0 %v372
        %444 = vmatprep.subr.mxu0 %v371
        %445 = vmatpush1.msra.mxu0 %v370
        %446 = vmatprep.subr.mxu0 0.0
        %447 = vmatpush2.msra.mxu0 0.0
        %448 = vmatprep.subr.mxu0 0.0
        %449 = vmatpush2.msra.mxu0 0.0
        %450 = vmatprep.subr.mxu0 0.0
        %451 = vmatpush2.msra.mxu0 0.0
        %452 = vmatprep.subr.mxu0 0.0
        %453 = vmatpush2.msra.mxu0 0.0
        %454 = vmatprep.subr.mxu0 0.0
        %455 = vmatpush2.msra.mxu0 0.0
        %456 = vmatprep.subr.mxu0 0.0
        %457 = vmatpush2.msra.mxu0 0.0
        %458 = vmatprep.subr.mxu0 0.0
        %459 = vmatpush2.msra.mxu0 0.0
        %460 = vmatprep.subr.mxu0 0.0
        %461 = vmatpush2.msra.mxu0 0.0
        %462 = vmatprep.subr.mxu0 0.0
        %463 = vmatpush2.msra.mxu0 0.0
        %464 = vmatprep.subr.mxu0 0.0
        %465 = vmatpush2.msra.mxu0 0.0
        %466 = vmatprep.subr.mxu0 0.0
        %467 = vmatpush2.msra.mxu0 0.0
        %468 = vmatprep.subr.mxu0 0.0
        %469 = vmatpush2.msra.mxu0 0.0
        %470 = vmatprep.subr.mxu0 0.0
        %471 = vmatpush2.msra.mxu0 0.0
        %472 = vmatprep.subr.mxu0 0.0
        %473 = vmatpush2.msra.mxu0 0.0
        %474 = vmatprep.subr.mxu0 0.0
        %475 = vmatpush2.msra.mxu0 0.0
        %476 = vmatprep.subr.mxu0 0.0
        %477 = vmatpush2.msra.mxu0 0.0
        %478 = vmatprep.mubr.f32.mxu0 0.0
        %479 = vmatmul.mubr.f32.gmra.mxu0 %v369
        %v480 = vpop.f32.mrf.mxu0
        %v481 = vadd.f32 %v407, %v480
        %v482 = vpop.f32.mrf.mxu0
        %v483 = vadd.f32 %v411, %v482
        %484 = vdwg.mxu0
        %v485 = vlaneseq
        %v486 = vshrl.u32 %v485, 7
        %vm487 = vcmp.lt.s32.totalorder %v486, 4
        %v488 = vsel %vm487, 1, 0
        %v489 = vcvt.s32.f32 %v488
        %v490 = vmul.f32 %v481, %v489
        %v491 = vmul.f32 %v483, %v489
        %v492 = vrot.slane %v490, 4
        %v493 = vadd.f32 %v490, %v492
        %v494 = vrot.slane %v493, 2
        %v495 = vadd.f32 %v493, %v494
        %v496 = vrot.slane %v495, 1
        %v497 = vadd.f32 %v495, %v496
        %v498 = vrot.slane %v491, 4
        %v499 = vadd.f32 %v491, %v498
        %v500 = vrot.slane %v499, 2
        %v501 = vadd.f32 %v499, %v500
        %v502 = vrot.slane %v501, 1
        %v503 = vadd.f32 %v501, %v502
        %v504 = vmul.f32 %v497, 0.25
        %v505 = vmul.f32 %v503, 0.25
        %v506 = vsub.f32 %v481, %v504
        %v507 = vsub.f32 %v483, %v505
        %v508 = vmul.f32 %v506, %v506
        %v509 = vmul.f32 %v507, %v507
        %v510 = vmul.f32 %v508, %v489
        %v511 = vmul.f32 %v509, %v489
        %v512 = vrot.slane %v510, 4
        %v513 = vadd.f32 %v510, %v512
        %v514 = vrot.slane %v513, 2
        %v515 = vadd.f32 %v513, %v514
        %v516 = vrot.slane %v515, 1
        %v517 = vadd.f32 %v515, %v516
        %v518 = vrot.slane %v511, 4
        %v519 = vadd.f32 %v511, %v518
        %v520 = vrot.slane %v519, 2
        %v521 = vadd.f32 %v519, %v520
        %v522 = vrot.slane %v521, 1
        %v523 = vadd.f32 %v521, %v522
        %v524 = vmul.f32 %v517, 0.25
        %v525 = vmul.f32 %v523, 0.25
        %v526 = vadd.f32 %v524, 1e-05
        %v527 = vadd.f32 %v525, 1e-05
        %v528 = vrsqrt.pop %v526
        %v529 = vrsqrt.pop %v527
        %v530 = vmul.f32 %v506, %v528
        %v531 = vmul.f32 %v507, %v529
        %v532 = vld [vmem:[%s313] sm:$0x3]
        %v534 = vlaneseq
        %v535 = vshrl.u32 %v534, 7
        %v536 = vsub.s32 0, %v535
        %v537 = vrot.slane %v532, %v536
        %v538 = vlaneseq
        %v539 = vshrl.u32 %v538, 7
        %v540 = vsub.s32 1, %v539
        %v541 = vrot.slane %v532, %v540
        %v544 = vmul.f32 %v530, %v537
        %v545 = vmul.f32 %v531, %v541
        %v546 = vld [vmem:[%s322] sm:$0x3]
        %v548 = vlaneseq
        %v549 = vshrl.u32 %v548, 7
        %v550 = vsub.s32 0, %v549
        %v551 = vrot.slane %v546, %v550
        %v552 = vlaneseq
        %v553 = vshrl.u32 %v552, 7
        %v554 = vsub.s32 1, %v553
        %v555 = vrot.slane %v546, %v554
        %v558 = vadd.f32 %v544, %v551
        %v559 = vadd.f32 %v545, %v555
        %v560 = vmax.f32 %v558, 0.0
        %v561 = vmax.f32 %v559, 0.0
        %562 = vst [vmem:[%s363] sm:$0xff] %v560
        %563 = vst [vmem:[%s363 + $0x8] sm:$0xff] %v561
        %s564 = sand.u32 %s159, 1
        %s565 = scalar_lea.sflag [#allocation4], %s564
        %s566 = sand.u32 %s159, 1
        %s567 = smul.addr %s566, 16
        %s568 = scalar_lea.vmem [#allocation11], %s567
        // Predicated region
        $region61: #{tpu_custom_call.1} parent=39 // pred_check
          %p569 = pneg %p169
        $region62: #{tpu_custom_call.1} parent=39 // pred_check_branch
          %571 = sbr.rel (%p569) target = $region64
        $region63: #{tpu_custom_call.1} parent=39 // pred_region
          %s572 = smul.u32 2, %s26
          %s574 = ssub.s32 256, 256
          %575 = vsyncadd %s565, %s574
          %s576 = smul.addr %s572, 128
          %s577 = scalar_lea.hbm %s5, %s576
          %s579 = sshll.u32 %s568, 4
          %s580 = int_to_ptr.vmem [resolvable:$true] %s579
          %582 = dma.vmem_to_hbm [thread:$0]  %s580, 256, %s577, %s565
        $region64: #{tpu_custom_call.1} parent=39 // pred_fallthru
          _
      $region40: #{tpu_custom_call.1} parent=5 // pred_fallthru
        _
      %p583 = scmp.le.s32.totalorder 2, %s21
      // Predicated region
      $region65: #{tpu_custom_call.1} parent=5 // pred_check
        %p584 = pneg %p583
      $region66: #{tpu_custom_call.1} parent=5 // pred_check_branch
        %586 = sbr.rel (%p584) target = $region68
      $region67: #{tpu_custom_call.1} parent=5 // pred_region
        %s587 = ssub.s32 %s21, 2
        // Predicated region
        $region69: #{tpu_custom_call.1} parent=67 // pred_check
          %p588 = pneg %p175
        $region70: #{tpu_custom_call.1} parent=67 // pred_check_branch
          %590 = sbr.rel (%p588) target = $region72
        $region71: #{tpu_custom_call.1} parent=67 // pred_region
          %s591 = sand.u32 %s160, 1
          %s592 = scalar_lea.sflag [#allocation4], %s591
          %s593 = sand.u32 %s160, 1
          %s594 = smul.addr %s593, 16
          %s595 = scalar_lea.vmem [#allocation11], %s594
          %596 = dma.done %s592, 256
        $region72: #{tpu_custom_call.1} parent=67 // pred_fallthru
          _
      $region68: #{tpu_custom_call.1} parent=5 // pred_fallthru
        _
    $region6: #{tpu_custom_call.1} parent=1 // loop_footer
      %s25 = sadd.s32 1, %s21
    $region7: #{tpu_custom_call.1} parent=1 // loop_footer_branch
      %20 = sbr.rel target = $region3
    $region8: #{tpu_custom_call.1} parent=1 // loop_exit
      _
    %597 = vsyncpa [#allocation3], 1
    %s598 = scalar_lea.sflag [#allocation3], 1
    %599 = vsyncpa %s598, 1
    %600 = vsyncpa [#allocation6], 1
    %s601 = scalar_lea.sflag [#allocation6], 1
    %602 = vsyncpa %s601, 1
    %603 = vsyncpa [#allocation9], 1
    %s604 = scalar_lea.sflag [#allocation9], 1
    %605 = vsyncpa %s604, 1
    %606 = vsyncpa [#allocation4], 1
    %s607 = scalar_lea.sflag [#allocation4], 1
    %608 = vsyncpa %s607, 1

</llo_original>
